<compile_context>
chip_gen: v7x
topology: tpu7x:2x2x1
jax: 0.10.0
libtpu: 0.0.40
codegen_flags: <defaults>
</compile_context>

<pallas_src>
import functools
import math

import jax
import jax.numpy as jnp
from jax.experimental import pallas as pl
from jax.experimental.pallas import tpu as pltpu

LANE = 128


def _soft_clamp(x, low, high):
    # soft_clamp(x, low, high) = low + 0.5*(high-low)*(tanh(x)+1)
    t = jnp.tanh(x)
    return low + 0.5 * (high - low) * (t + 1.0)


def _round_up(x, m):
    return ((x + m - 1) // m) * m


def _resident_spec(shape):
    """BlockSpec for a VMEM-resident array (constant index_map, DMA'd once).

    Constant-index inputs do not need double buffering; request a single
    buffer if this jax version supports pipeline_mode, else fall back.
    """
    idx = lambda i: (0,) * len(shape)
    try:
        return pl.BlockSpec(shape, idx, pipeline_mode=pl.Buffered(1))
    except TypeError:
        return pl.BlockSpec(shape, idx)


def _gauss_mlp_kernel(action_dim, n_linear, compute_dtype, *refs):
    # refs = (x_ref, wT0, b0, wT1, b1, ..., wT_{L-1}, b_{L-1}, out_ref)
    # x_ref:   (state_dim, TILE_B)   compute_dtype   (batch on the lane axis)
    # wT_l:    (out_l, in_l)         compute_dtype   (VMEM-resident)
    # b_l:     (out_l, 1)            float32         (broadcasts along lanes)
    # out_ref: (2*action_dim, TILE_B)
    x_ref = refs[0]
    param_refs = refs[1:1 + 2 * n_linear]
    out_ref = refs[1 + 2 * n_linear]

    h = x_ref[...]
    for li in range(n_linear):
        w_t = param_refs[2 * li][...]
        b = param_refs[2 * li + 1][...]
        # MXU matmul with f32 accumulation; batch (TILE_B) is the MXU N axis.
        h = jnp.dot(w_t, h, preferred_element_type=jnp.float32) + b
        if li < n_linear - 1:                       # ReLU on all but last layer
            h = jnp.maximum(h, 0.0).astype(compute_dtype)

    # h: (2A, TILE_B) f32. Rows [0, A) -> mu, [A, 2A) -> log_std.
    # Row-index mask (sublane axis) selects per-row clamp bounds; exp is only
    # kept on the log_std rows.  No lane shuffles / XLU relayout needed.
    two_a = 2 * action_dim
    row = jax.lax.broadcasted_iota(jnp.int32, (two_a, 1), 0)
    is_mu = row < action_dim
    low = jnp.where(is_mu, -1.0, -5.0)              # mu_bounds / log_std_bounds
    high = jnp.where(is_mu, 1.0, 0.0)
    clamped = low + 0.5 * (high - low) * (jnp.tanh(h) + 1.0)   # f32 EUP tanh
    out = jnp.where(is_mu, clamped, jnp.exp(clamped))          # std = exp(log_std)
    out_ref[...] = out.astype(out_ref.dtype)        # single lane-dense store


def gauss_mlp_forward(s, params, action_dim, dist_type="normal",
                      tile_b=4096, use_bf16=True):
    """GaussMLP forward. Returns (mu, std) of the resulting distribution.

    s: [B, ...] float32 (flattened to [B, state_dim]).
    params: list of (W [in, out], b [1, out]) tuples (PyTorch Linear layout).
    """
    B = s.shape[0]
    s = s.reshape(B, -1).astype(jnp.float32)
    state_dim = s.shape[1]

    n_linear = len(params)
    assert params[0][0].shape[0] == state_dim, "state_dim mismatch"
    assert params[-1][0].shape[1] == 2 * action_dim, \
        "last layer must output 2*action_dim (mu | log_std)"

    compute_dtype = jnp.bfloat16 if use_bf16 else jnp.float32
    out_dtype = jnp.bfloat16 if use_bf16 else jnp.float32

    # ----- batch-tile selection (batch lives on the LANE axis: align to 128).
    bp_min = _round_up(B, LANE)
    tile_b = max(LANE, min(tile_b, bp_min))
    tile_b = _round_up(tile_b, LANE)
    # Keep >= 2 grid steps when the batch spans more than one lane tile, so
    # v7x's second TensorCore gets work via the "parallel" grid axis.
    half = _round_up((bp_min + 1) // 2, LANE)
    if bp_min >= 2 * LANE and tile_b > half:
        tile_b = half
    bp = _round_up(B, tile_b)

    # Feature-major input: (state_dim, Bp) with the batch padded on lanes.
    s_t = s.T.astype(compute_dtype)
    if bp != B:
        s_t = jnp.pad(s_t, ((0, 0), (0, bp - B)))

    # Weights pre-transposed to (out, in) in the compute dtype; biases (out, 1)
    # f32 (added to the f32 accumulator, broadcast along lanes).
    flat_params = []
    in_specs = [pl.BlockSpec((state_dim, tile_b), lambda i: (0, i))]
    for (w, b) in params:
        w_t = jnp.asarray(w).T.astype(compute_dtype)         # (out, in)
        b_c = jnp.asarray(b).reshape(-1, 1).astype(jnp.float32)  # (out, 1)
        flat_params.append(w_t)
        flat_params.append(b_c)
        in_specs.append(_resident_spec(w_t.shape))
        in_specs.append(_resident_spec(b_c.shape))

    out_rows = 2 * action_dim
    out_shape = jax.ShapeDtypeStruct((out_rows, bp), out_dtype)
    out_specs = pl.BlockSpec((out_rows, tile_b), lambda i: (0, i))

    kernel = functools.partial(_gauss_mlp_kernel, action_dim, n_linear,
                               compute_dtype)

    out = pl.pallas_call(
        kernel,
        out_shape=out_shape,
        grid=(bp // tile_b,),
        in_specs=in_specs,
        out_specs=out_specs,
        compiler_params=pltpu.CompilerParams(
            dimension_semantics=("parallel",)),   # megacore split on v7x
    )(s_t, *flat_params)

    out = out.astype(jnp.float32)
    mu = out[:action_dim, :B].T
    std = out[action_dim:, :B].T
    del dist_type  # only selects which Distribution (mu, std) would feed
    return mu, std


def init_params(key, state_dim, action_dim, width, depth):
    """Deterministic PyTorch-style Linear init: U(-1/sqrt(fan_in), 1/sqrt(fan_in))."""
    dims = [state_dim] + [width] * depth + [2 * action_dim]
    params = []
    for i in range(len(dims) - 1):
        fan_in, fan_out = dims[i], dims[i + 1]
        key, kw, kb = jax.random.split(key, 3)
        bound = 1.0 / math.sqrt(fan_in)
        w = jax.random.uniform(kw, (fan_in, fan_out), jnp.float32, -bound, bound)
        b = jax.random.uniform(kb, (1, fan_out), jnp.float32, -bound, bound)
        params.append((w, b))
    return params


def _reference_forward(s, params, action_dim):
    h = s.reshape(s.shape[0], -1)
    for i, (w, b) in enumerate(params):
        h = h @ w + b
        if i < len(params) - 1:
            h = jnp.maximum(h, 0.0)
    mu_raw, ls_raw = h[:, :action_dim], h[:, action_dim:]
    mu = _soft_clamp(mu_raw, -1.0, 1.0)
    ls = _soft_clamp(ls_raw, -5.0, 0.0)
    return mu, jnp.exp(ls)


if __name__ == "__main__":
    STATE_DIM, ACTION_DIM, WIDTH, DEPTH = 16, 8, 32, 2

    key = jax.random.PRNGKey(0)
    k_s1, k_s2, k_s3, k_p = jax.random.split(key, 4)
    params = init_params(k_p, STATE_DIM, ACTION_DIM, WIDTH, DEPTH)

    # 1) f32 matmul path, small batch (exercises lane padding): tight check.
    s1 = jax.random.normal(k_s1, (8, STATE_DIM), jnp.float32)
    mu1, std1 = gauss_mlp_forward(s1, params, ACTION_DIM,
                                  dist_type="normal", use_bf16=False)
    mu1, std1 = jax.block_until_ready(mu1), jax.block_until_ready(std1)
    mu1_ref, std1_ref = _reference_forward(s1, params, ACTION_DIM)
    assert mu1.shape == (8, ACTION_DIM) and std1.shape == (8, ACTION_DIM)
    assert jnp.allclose(mu1, mu1_ref, atol=1e-5), "mu mismatch (f32 path)"
    assert jnp.allclose(std1, std1_ref, atol=1e-5), "std mismatch (f32 path)"

    # 2) bf16 matmul + bf16 output path with a ragged batch: looser tolerance.
    s2 = jax.random.normal(k_s2, (20, STATE_DIM), jnp.float32)
    mu2, std2 = gauss_mlp_forward(s2, params, ACTION_DIM,
                                  dist_type="squash", use_bf16=True)
    mu2, std2 = jax.block_until_ready(mu2), jax.block_until_ready(std2)
    mu2_ref, std2_ref = _reference_forward(s2, params, ACTION_DIM)
    assert mu2.shape == (20, ACTION_DIM) and std2.shape == (20, ACTION_DIM)
    assert jnp.allclose(mu2, mu2_ref, atol=2e-2, rtol=2e-2), "mu mismatch (bf16 path)"
    assert jnp.allclose(std2, std2_ref, atol=2e-2, rtol=2e-2), "std mismatch (bf16 path)"

    # 3) f32 path with a batch large enough for a multi-step grid
    #    (exercises pipelining + the >=2-step megacore cap + padding).
    s3 = jax.random.normal(k_s3, (300, STATE_DIM), jnp.float32)
    mu3, std3 = gauss_mlp_forward(s3, params, ACTION_DIM,
                                  dist_type="trunc", use_bf16=False)
    mu3, std3 = jax.block_until_ready(mu3), jax.block_until_ready(std3)
    mu3_ref, std3_ref = _reference_forward(s3, params, ACTION_DIM)
    assert mu3.shape == (300, ACTION_DIM) and std3.shape == (300, ACTION_DIM)
    assert jnp.allclose(mu3, mu3_ref, atol=1e-5), "mu mismatch (multi-step grid)"
    assert jnp.allclose(std3, std3_ref, atol=1e-5), "std mismatch (multi-step grid)"

    print("KERNEL_OK")
</pallas_src>

<mosaic_0001>
module attributes {stable_mosaic.version = 11 : i64} {
  func.func @_gauss_mlp_kernel(%arg0: i32, %arg1: memref<16x128xf32, #tpu.memory_space<vmem>>, %arg2: memref<32x16xf32, #tpu.memory_space<vmem>>, %arg3: memref<32x1xf32, #tpu.memory_space<vmem>>, %arg4: memref<32x32xf32, #tpu.memory_space<vmem>>, %arg5: memref<32x1xf32, #tpu.memory_space<vmem>>, %arg6: memref<16x32xf32, #tpu.memory_space<vmem>>, %arg7: memref<16x1xf32, #tpu.memory_space<vmem>>, %arg8: memref<16x128xf32, #tpu.memory_space<vmem>>) attributes {dimension_semantics = [#tpu.dimension_semantics<parallel>], iteration_bounds = array<i64: 1>, scalar_prefetch = 0 : i64, scratch_operands = 0 : i64, tpu.core_type = #tpu.core_type<tc>, window_params = [{transform_indices = @transform_0, window_bounds = array<i64: 16, 128>}, {pipeline_mode = #tpu.pipeline_mode<synchronous>, transform_indices = @transform_1, window_bounds = array<i64: 32, 16>}, {pipeline_mode = #tpu.pipeline_mode<synchronous>, transform_indices = @transform_2, window_bounds = array<i64: 32, 1>}, {pipeline_mode = #tpu.pipeline_mode<synchronous>, transform_indices = @transform_3, window_bounds = array<i64: 32, 32>}, {pipeline_mode = #tpu.pipeline_mode<synchronous>, transform_indices = @transform_4, window_bounds = array<i64: 32, 1>}, {pipeline_mode = #tpu.pipeline_mode<synchronous>, transform_indices = @transform_5, window_bounds = array<i64: 16, 32>}, {pipeline_mode = #tpu.pipeline_mode<synchronous>, transform_indices = @transform_6, window_bounds = array<i64: 16, 1>}, {transform_indices = @transform_7, window_bounds = array<i64: 16, 128>}]} {
    %c0 = arith.constant 0 : index
    %c0_0 = arith.constant 0 : index
    %0 = vector.load %arg1[%c0, %c0_0] : memref<16x128xf32, #tpu.memory_space<vmem>>, vector<16x128xf32>
    %c0_1 = arith.constant 0 : index
    %c0_2 = arith.constant 0 : index
    %1 = vector.load %arg2[%c0_1, %c0_2] : memref<32x16xf32, #tpu.memory_space<vmem>>, vector<32x16xf32>
    %c0_3 = arith.constant 0 : index
    %c0_4 = arith.constant 0 : index
    %2 = vector.load %arg3[%c0_3, %c0_4] : memref<32x1xf32, #tpu.memory_space<vmem>>, vector<32x1xf32>
    %cst = arith.constant dense<0.000000e+00> : vector<32x128xf32>
    %3 = tpu.matmul %1, %0, %cst {dimension_numbers = #tpu.dot_dimension_numbers<[1], [0], [0], [1], [0, 0, 1, 1], [], []>} : vector<32x16xf32>, vector<16x128xf32>, vector<32x128xf32> -> vector<32x128xf32>
    %4 = vector.broadcast %2 : vector<32x1xf32> to vector<32x128xf32>
    %5 = arith.addf %3, %4 : vector<32x128xf32>
    %cst_5 = arith.constant 0.000000e+00 : f32
    %6 = vector.broadcast %cst_5 : f32 to vector<32x128xf32>
    %7 = arith.maximumf %5, %6 : vector<32x128xf32>
    %c0_6 = arith.constant 0 : index
    %c0_7 = arith.constant 0 : index
    %8 = vector.load %arg4[%c0_6, %c0_7] : memref<32x32xf32, #tpu.memory_space<vmem>>, vector<32x32xf32>
    %c0_8 = arith.constant 0 : index
    %c0_9 = arith.constant 0 : index
    %9 = vector.load %arg5[%c0_8, %c0_9] : memref<32x1xf32, #tpu.memory_space<vmem>>, vector<32x1xf32>
    %cst_10 = arith.constant dense<0.000000e+00> : vector<32x128xf32>
    %10 = tpu.matmul %8, %7, %cst_10 {dimension_numbers = #tpu.dot_dimension_numbers<[1], [0], [0], [1], [0, 0, 1, 1], [], []>} : vector<32x32xf32>, vector<32x128xf32>, vector<32x128xf32> -> vector<32x128xf32>
    %11 = vector.broadcast %9 : vector<32x1xf32> to vector<32x128xf32>
    %12 = arith.addf %10, %11 : vector<32x128xf32>
    %cst_11 = arith.constant 0.000000e+00 : f32
    %13 = vector.broadcast %cst_11 : f32 to vector<32x128xf32>
    %14 = arith.maximumf %12, %13 : vector<32x128xf32>
    %c0_12 = arith.constant 0 : index
    %c0_13 = arith.constant 0 : index
    %15 = vector.load %arg6[%c0_12, %c0_13] : memref<16x32xf32, #tpu.memory_space<vmem>>, vector<16x32xf32>
    %c0_14 = arith.constant 0 : index
    %c0_15 = arith.constant 0 : index
    %16 = vector.load %arg7[%c0_14, %c0_15] : memref<16x1xf32, #tpu.memory_space<vmem>>, vector<16x1xf32>
    %cst_16 = arith.constant dense<0.000000e+00> : vector<16x128xf32>
    %17 = tpu.matmul %15, %14, %cst_16 {dimension_numbers = #tpu.dot_dimension_numbers<[1], [0], [0], [1], [0, 0, 1, 1], [], []>} : vector<16x32xf32>, vector<32x128xf32>, vector<16x128xf32> -> vector<16x128xf32>
    %18 = vector.broadcast %16 : vector<16x1xf32> to vector<16x128xf32>
    %19 = arith.addf %17, %18 : vector<16x128xf32>
    %20 = tpu.iota {dimensions = array<i32: 0>} : vector<16x1xi32>
    %c8_i32 = arith.constant 8 : i32
    %21 = vector.broadcast %c8_i32 : i32 to vector<16x1xi32>
    %22 = arith.cmpi slt, %20, %21 : vector<16x1xi32>
    %cst_17 = arith.constant -1.000000e+00 : f32
    %cst_18 = arith.constant -5.000000e+00 : f32
    %23 = vector.broadcast %cst_17 : f32 to vector<16x1xf32>
    %24 = vector.broadcast %cst_18 : f32 to vector<16x1xf32>
    %25 = arith.select %22, %23, %24 : vector<16x1xi1>, vector<16x1xf32>
    %cst_19 = arith.constant 1.000000e+00 : f32
    %cst_20 = arith.constant 0.000000e+00 : f32
    %26 = vector.broadcast %cst_19 : f32 to vector<16x1xf32>
    %27 = vector.broadcast %cst_20 : f32 to vector<16x1xf32>
    %28 = arith.select %22, %26, %27 : vector<16x1xi1>, vector<16x1xf32>
    %29 = arith.subf %28, %25 : vector<16x1xf32>
    %cst_21 = arith.constant 5.000000e-01 : f32
    %30 = vector.broadcast %cst_21 : f32 to vector<16x1xf32>
    %31 = arith.mulf %30, %29 : vector<16x1xf32>
    %32 = math.tanh %19 : vector<16x128xf32>
    %cst_22 = arith.constant 1.000000e+00 : f32
    %33 = vector.broadcast %cst_22 : f32 to vector<16x128xf32>
    %34 = arith.addf %32, %33 : vector<16x128xf32>
    %35 = vector.broadcast %31 : vector<16x1xf32> to vector<16x128xf32>
    %36 = arith.mulf %35, %34 : vector<16x128xf32>
    %37 = vector.broadcast %25 : vector<16x1xf32> to vector<16x128xf32>
    %38 = arith.addf %37, %36 : vector<16x128xf32>
    %39 = math.exp %38 : vector<16x128xf32>
    %40 = vector.shape_cast %22 : vector<16x1xi1> to vector<16x1xi1>
    %41 = vector.broadcast %40 : vector<16x1xi1> to vector<16x128xi1>
    %42 = arith.select %41, %38, %39 : vector<16x128xi1>, vector<16x128xf32>
    %c0_23 = arith.constant 0 : index
    %c0_24 = arith.constant 0 : index
    %43 = vector.load %arg8[%c0_23, %c0_24] : memref<16x128xf32, #tpu.memory_space<vmem>>, vector<16x128xf32>
    tpu.vector_store %arg8[%c0_23, %c0_24], %42 {strides = array<i32>} : memref<16x128xf32, #tpu.memory_space<vmem>>, vector<16x128xf32>,
    return
  }
  func.func @transform_0(%arg0: i32) -> (i32, i32) {
    %c0_i32 = arith.constant 0 : i32
    %c0_i32_0 = arith.constant 0 : i32
    return %c0_i32, %arg0 : i32, i32
  }
  func.func @transform_1(%arg0: i32) -> (i32, i32) {
    %c0_i32 = arith.constant 0 : i32
    %c0_i32_0 = arith.constant 0 : i32
    %c0_i32_1 = arith.constant 0 : i32
    return %c0_i32, %c0_i32_0 : i32, i32
  }
  func.func @transform_2(%arg0: i32) -> (i32, i32) {
    %c0_i32 = arith.constant 0 : i32
    %c0_i32_0 = arith.constant 0 : i32
    %c0_i32_1 = arith.constant 0 : i32
    return %c0_i32, %c0_i32_0 : i32, i32
  }
  func.func @transform_3(%arg0: i32) -> (i32, i32) {
    %c0_i32 = arith.constant 0 : i32
    %c0_i32_0 = arith.constant 0 : i32
    %c0_i32_1 = arith.constant 0 : i32
    return %c0_i32, %c0_i32_0 : i32, i32
  }
  func.func @transform_4(%arg0: i32) -> (i32, i32) {
    %c0_i32 = arith.constant 0 : i32
    %c0_i32_0 = arith.constant 0 : i32
    %c0_i32_1 = arith.constant 0 : i32
    return %c0_i32, %c0_i32_0 : i32, i32
  }
  func.func @transform_5(%arg0: i32) -> (i32, i32) {
    %c0_i32 = arith.constant 0 : i32
    %c0_i32_0 = arith.constant 0 : i32
    %c0_i32_1 = arith.constant 0 : i32
    return %c0_i32, %c0_i32_0 : i32, i32
  }
  func.func @transform_6(%arg0: i32) -> (i32, i32) {
    %c0_i32 = arith.constant 0 : i32
    %c0_i32_0 = arith.constant 0 : i32
    %c0_i32_1 = arith.constant 0 : i32
    return %c0_i32, %c0_i32_0 : i32, i32
  }
  func.func @transform_7(%arg0: i32) -> (i32, i32) {
    %c0_i32 = arith.constant 0 : i32
    %c0_i32_0 = arith.constant 0 : i32
    return %c0_i32, %arg0 : i32, i32
  }
}

</mosaic_0001>

<llo_original>
// kernel: tpu_custom_call.1
$region0: #{tpu_custom_call.1}
  #allocation0 [shape = 'u32[]', space=smem, size = 0x4, offset = 0x4, fixed_abs, tag = 'smem constant byte address 0x4 - core index']
  #allocation1 [shape = 'u32[144,128]{1,0:T(1,128)}', space=vmem, size = 0x12000, scoped, tag = 'internal scratch']
  %s0 = inlined_call_operand.vmem [shape: f32[16,128], index: 0, kind: input, shape index: {}]
  %s1 = inlined_call_operand.vmem [shape: f32[32,16], index: 1, kind: input, shape index: {}]
  %s2 = inlined_call_operand.vmem [shape: f32[32,1], index: 2, kind: input, shape index: {}]
  %s3 = inlined_call_operand.vmem [shape: f32[32,32], index: 3, kind: input, shape index: {}]
  %s4 = inlined_call_operand.vmem [shape: f32[32,1], index: 4, kind: input, shape index: {}]
  %s5 = inlined_call_operand.vmem [shape: f32[16,32], index: 5, kind: input, shape index: {}]
  %s6 = inlined_call_operand.vmem [shape: f32[16,1], index: 6, kind: input, shape index: {}]
  %s7 = inlined_call_operand.hbm [shape: f32[16,128], index: 7, kind: output, shape index: {}]
  %s8 = sld [smem:[#allocation0]]
  $region38: #{tpu_custom_call.1} parent=0
    _
  %s10 = ssub.s32 1, %s8
  %s11 = scalar_select 0, %s10, %s8
  $region1: #{tpu_custom_call.1} parent=0
    #allocation2 [shape = 'u8[8192]{0}', space=vmem, size = 0x2000, scoped, tag = 'output window, operand 0, single buffered']
    #allocation3 [shape = 's32[1]{0}', space=sflag, size = 0x4, scoped, tag = 'scoped memory for tpu_custom_call.1']
    %12 = vsyncpa [#allocation3], 0
    // Predicated region
    $region2: #{tpu_custom_call.1} parent=1 // pred_check
      _
    $region3: #{tpu_custom_call.1} parent=1 // pred_check_branch
      %14 = sbr.rel (0) target = $region5
    $region4: #{tpu_custom_call.1} parent=1 // pred_region
      _
    $region5: #{tpu_custom_call.1} parent=1 // pred_fallthru
      _
    // Predicated region
    $region6: #{tpu_custom_call.1} parent=1 // pred_check
      _
    $region7: #{tpu_custom_call.1} parent=1 // pred_check_branch
      %16 = sbr.rel (0) target = $region9
    $region8: #{tpu_custom_call.1} parent=1 // pred_region
      _
    $region9: #{tpu_custom_call.1} parent=1 // pred_fallthru
      _
    // Predicated region
    $region10: #{tpu_custom_call.1} parent=1 // pred_check
      _
    $region11: #{tpu_custom_call.1} parent=1 // pred_check_branch
      %18 = sbr.rel (0) target = $region13
    $region12: #{tpu_custom_call.1} parent=1 // pred_region
      _
    $region13: #{tpu_custom_call.1} parent=1 // pred_fallthru
      _
    // Predicated region
    $region14: #{tpu_custom_call.1} parent=1 // pred_check
      _
    $region15: #{tpu_custom_call.1} parent=1 // pred_check_branch
      %20 = sbr.rel (0) target = $region17
    $region16: #{tpu_custom_call.1} parent=1 // pred_region
      _
    $region17: #{tpu_custom_call.1} parent=1 // pred_fallthru
      _
    // Predicated region
    $region18: #{tpu_custom_call.1} parent=1 // pred_check
      _
    $region19: #{tpu_custom_call.1} parent=1 // pred_check_branch
      %22 = sbr.rel (0) target = $region21
    $region20: #{tpu_custom_call.1} parent=1 // pred_region
      _
    $region21: #{tpu_custom_call.1} parent=1 // pred_fallthru
      _
    // Predicated region
    $region22: #{tpu_custom_call.1} parent=1 // pred_check
      _
    $region23: #{tpu_custom_call.1} parent=1 // pred_check_branch
      %24 = sbr.rel (0) target = $region25
    $region24: #{tpu_custom_call.1} parent=1 // pred_region
      _
    $region25: #{tpu_custom_call.1} parent=1 // pred_fallthru
      _
    // Predicated region
    $region26: #{tpu_custom_call.1} parent=1 // pred_check
      _
    $region27: #{tpu_custom_call.1} parent=1 // pred_check_branch
      %26 = sbr.rel (0) target = $region29
    $region28: #{tpu_custom_call.1} parent=1 // pred_region
      _
    $region29: #{tpu_custom_call.1} parent=1 // pred_fallthru
      _
    %v27 = vld [vmem:[%s0] sm:$0xff]
    %v28 = vld [vmem:[%s0 + $0x8] sm:$0xff]
    %v29 = vld [vmem:[%s1] sm:$0xff]
    %v30 = vld [vmem:[%s1 + $0x8] sm:$0xff]
    %v31 = vld [vmem:[%s1 + $0x10] sm:$0xff]
    %v32 = vld [vmem:[%s1 + $0x18] sm:$0xff]
    %v33 = vld [vmem:[%s2] sm:$0xff]
    %v34 = vld [vmem:[%s2 + $0x8] sm:$0xff]
    %v35 = vld [vmem:[%s2 + $0x10] sm:$0xff]
    %v36 = vld [vmem:[%s2 + $0x18] sm:$0xff]
    %38 = vset.pattern.permute.xlu0 0
    %39 = vperm.xlu0 %38, %v33
    %v40 = vpop.permute.xlu0 %39
    %43 = vset.pattern.permute.xlu0 0
    %44 = vperm.xlu0 %43, %v34
    %v45 = vpop.permute.xlu0 %44
    %48 = vset.pattern.permute.xlu0 0
    %49 = vperm.xlu0 %48, %v35
    %v50 = vpop.permute.xlu0 %49
    %53 = vset.pattern.permute.xlu0 0
    %54 = vperm.xlu0 %53, %v36
    %v55 = vpop.permute.xlu0 %54
    %vm57 = vcmask 130048
    %v59 = vsel %vm57, %v29, 0
    %v62 = vsel %vm57, %v30, 0
    %v65 = vsel %vm57, %v31, 0
    %v68 = vsel %vm57, %v32, 0
    %70 = vmatprep.subr.mxu0 0.0
    %71 = vmatpush1.msra.mxu0 %v27
    %72 = vmatprep.subr.mxu0 0.0
    %73 = vmatpush1.msra.mxu0 %v28
    %74 = vmatprep.subr.mxu0 0.0
    %75 = vmatpush1.msra.mxu0 0.0
    %76 = vmatprep.subr.mxu0 0.0
    %77 = vmatpush1.msra.mxu0 0.0
    %78 = vmatprep.subr.mxu0 0.0
    %79 = vmatpush1.msra.mxu0 0.0
    %80 = vmatprep.subr.mxu0 0.0
    %81 = vmatpush1.msra.mxu0 0.0
    %82 = vmatprep.subr.mxu0 0.0
    %83 = vmatpush1.msra.mxu0 0.0
    %84 = vmatprep.subr.mxu0 0.0
    %85 = vmatpush1.msra.mxu0 0.0
    %86 = vmatprep.subr.mxu0 0.0
    %87 = vmatpush1.msra.mxu0 0.0
    %88 = vmatprep.subr.mxu0 0.0
    %89 = vmatpush1.msra.mxu0 0.0
    %90 = vmatprep.subr.mxu0 0.0
    %91 = vmatpush1.msra.mxu0 0.0
    %92 = vmatprep.subr.mxu0 0.0
    %93 = vmatpush1.msra.mxu0 0.0
    %94 = vmatprep.subr.mxu0 0.0
    %95 = vmatpush1.msra.mxu0 0.0
    %96 = vmatprep.subr.mxu0 0.0
    %97 = vmatpush1.msra.mxu0 0.0
    %98 = vmatprep.subr.mxu0 0.0
    %99 = vmatpush1.msra.mxu0 0.0
    %100 = vmatprep.subr.mxu0 0.0
    %101 = vmatpush1.msra.mxu0 0.0
    %102 = vmatprep.subr.mxu0 0.0
    %103 = vmatpush1.msra.mxu0 0.0
    %104 = vmatprep.subr.mxu0 0.0
    %105 = vmatpush1.msra.mxu0 0.0
    %106 = vmatprep.subr.mxu0 0.0
    %107 = vmatpush1.msra.mxu0 0.0
    %108 = vmatprep.subr.mxu0 0.0
    %109 = vmatpush1.msra.mxu0 0.0
    %110 = vmatprep.subr.mxu0 0.0
    %111 = vmatpush1.msra.mxu0 0.0
    %112 = vmatprep.subr.mxu0 0.0
    %113 = vmatpush1.msra.mxu0 0.0
    %114 = vmatprep.subr.mxu0 0.0
    %115 = vmatpush1.msra.mxu0 0.0
    %116 = vmatprep.subr.mxu0 0.0
    %117 = vmatpush1.msra.mxu0 0.0
    %118 = vmatprep.subr.mxu0 0.0
    %119 = vmatpush1.msra.mxu0 0.0
    %120 = vmatprep.subr.mxu0 0.0
    %121 = vmatpush1.msra.mxu0 0.0
    %122 = vmatprep.subr.mxu0 0.0
    %123 = vmatpush1.msra.mxu0 0.0
    %124 = vmatprep.subr.mxu0 0.0
    %125 = vmatpush1.msra.mxu0 0.0
    %126 = vmatprep.subr.mxu0 0.0
    %127 = vmatpush1.msra.mxu0 0.0
    %128 = vmatprep.subr.mxu0 0.0
    %129 = vmatpush1.msra.mxu0 0.0
    %130 = vmatprep.subr.mxu0 0.0
    %131 = vmatpush1.msra.mxu0 0.0
    %132 = vmatprep.subr.mxu0 0.0
    %133 = vmatpush1.msra.mxu0 0.0
    %134 = vmatprep.mubr.f32.mxu0 0.0
    %135 = vmatmul.mubr.f32.gmra.mrb[0].mxu0 %v59
    %v136 = vpop.f32.mrb[0].mxu0
    %v137 = vadd.f32 %v40, %v136
    %v138 = vpop.f32.mrb[0].mxu0
    %139 = vmatprep.mubr.f32.mxu0 0.0
    %140 = vmatmul.mubr.f32.gmra.mrb[0].mxu0 %v62
    %v141 = vpop.f32.mrb[0].mxu0
    %v142 = vadd.f32 %v45, %v141
    %v143 = vpop.f32.mrb[0].mxu0
    %144 = vmatprep.mubr.f32.mxu0 0.0
    %145 = vmatmul.mubr.f32.gmra.mrb[0].mxu0 %v65
    %v146 = vpop.f32.mrb[0].mxu0
    %v147 = vadd.f32 %v50, %v146
    %v148 = vpop.f32.mrb[0].mxu0
    %149 = vmatprep.mubr.f32.mxu0 0.0
    %150 = vmatmul.mubr.f32.gmra.mrb[0].mxu0 %v68
    %v151 = vpop.f32.mrb[0].mxu0
    %v152 = vadd.f32 %v55, %v151
    %v153 = vpop.f32.mrb[0].mxu0
    %154 = vdwg.mxu0
    %v155 = vmax.f32 %v137, 0.0
    %v156 = vmax.f32 %v142, 0.0
    %v157 = vmax.f32 %v147, 0.0
    %v158 = vmax.f32 %v152, 0.0
    %v159 = vld [vmem:[%s3] sm:$0xff]
    %v160 = vld [vmem:[%s3 + $0x8] sm:$0xff]
    %v161 = vld [vmem:[%s3 + $0x10] sm:$0xff]
    %v162 = vld [vmem:[%s3 + $0x18] sm:$0xff]
    %v163 = vld [vmem:[%s4] sm:$0xff]
    %v164 = vld [vmem:[%s4 + $0x8] sm:$0xff]
    %v165 = vld [vmem:[%s4 + $0x10] sm:$0xff]
    %v166 = vld [vmem:[%s4 + $0x18] sm:$0xff]
    %168 = vset.pattern.permute.xlu0 0
    %169 = vperm.xlu0 %168, %v163
    %v170 = vpop.permute.xlu0 %169
    %173 = vset.pattern.permute.xlu0 0
    %174 = vperm.xlu0 %173, %v164
    %v175 = vpop.permute.xlu0 %174
    %178 = vset.pattern.permute.xlu0 0
    %179 = vperm.xlu0 %178, %v165
    %v180 = vpop.permute.xlu0 %179
    %183 = vset.pattern.permute.xlu0 0
    %184 = vperm.xlu0 %183, %v166
    %v185 = vpop.permute.xlu0 %184
    %vm187 = vcmask 261120
    %v189 = vsel %vm187, %v159, 0
    %v192 = vsel %vm187, %v160, 0
    %v195 = vsel %vm187, %v161, 0
    %v198 = vsel %vm187, %v162, 0
    %200 = vmatprep.subr.mxu0 0.0
    %201 = vmatpush1.msra.mxu0 %v155
    %202 = vmatprep.subr.mxu0 0.0
    %203 = vmatpush1.msra.mxu0 %v156
    %204 = vmatprep.subr.mxu0 0.0
    %205 = vmatpush1.msra.mxu0 %v157
    %206 = vmatprep.subr.mxu0 0.0
    %207 = vmatpush1.msra.mxu0 %v158
    %208 = vmatprep.subr.mxu0 0.0
    %209 = vmatpush1.msra.mxu0 0.0
    %210 = vmatprep.subr.mxu0 0.0
    %211 = vmatpush1.msra.mxu0 0.0
    %212 = vmatprep.subr.mxu0 0.0
    %213 = vmatpush1.msra.mxu0 0.0
    %214 = vmatprep.subr.mxu0 0.0
    %215 = vmatpush1.msra.mxu0 0.0
    %216 = vmatprep.subr.mxu0 0.0
    %217 = vmatpush1.msra.mxu0 0.0
    %218 = vmatprep.subr.mxu0 0.0
    %219 = vmatpush1.msra.mxu0 0.0
    %220 = vmatprep.subr.mxu0 0.0
    %221 = vmatpush1.msra.mxu0 0.0
    %222 = vmatprep.subr.mxu0 0.0
    %223 = vmatpush1.msra.mxu0 0.0
    %224 = vmatprep.subr.mxu0 0.0
    %225 = vmatpush1.msra.mxu0 0.0
    %226 = vmatprep.subr.mxu0 0.0
    %227 = vmatpush1.msra.mxu0 0.0
    %228 = vmatprep.subr.mxu0 0.0
    %229 = vmatpush1.msra.mxu0 0.0
    %230 = vmatprep.subr.mxu0 0.0
    %231 = vmatpush1.msra.mxu0 0.0
    %232 = vmatprep.subr.mxu0 0.0
    %233 = vmatpush1.msra.mxu0 0.0
    %234 = vmatprep.subr.mxu0 0.0
    %235 = vmatpush1.msra.mxu0 0.0
    %236 = vmatprep.subr.mxu0 0.0
    %237 = vmatpush1.msra.mxu0 0.0
    %238 = vmatprep.subr.mxu0 0.0
    %239 = vmatpush1.msra.mxu0 0.0
    %240 = vmatprep.subr.mxu0 0.0
    %241 = vmatpush1.msra.mxu0 0.0
    %242 = vmatprep.subr.mxu0 0.0
    %243 = vmatpush1.msra.mxu0 0.0
    %244 = vmatprep.subr.mxu0 0.0
    %245 = vmatpush1.msra.mxu0 0.0
    %246 = vmatprep.subr.mxu0 0.0
    %247 = vmatpush1.msra.mxu0 0.0
    %248 = vmatprep.subr.mxu0 0.0
    %249 = vmatpush1.msra.mxu0 0.0
    %250 = vmatprep.subr.mxu0 0.0
    %251 = vmatpush1.msra.mxu0 0.0
    %252 = vmatprep.subr.mxu0 0.0
    %253 = vmatpush1.msra.mxu0 0.0
    %254 = vmatprep.subr.mxu0 0.0
    %255 = vmatpush1.msra.mxu0 0.0
    %256 = vmatprep.subr.mxu0 0.0
    %257 = vmatpush1.msra.mxu0 0.0
    %258 = vmatprep.subr.mxu0 0.0
    %259 = vmatpush1.msra.mxu0 0.0
    %260 = vmatprep.subr.mxu0 0.0
    %261 = vmatpush1.msra.mxu0 0.0
    %262 = vmatprep.subr.mxu0 0.0
    %263 = vmatpush1.msra.mxu0 0.0
    %264 = vmatprep.mubr.f32.mxu0 0.0
    %265 = vmatmul.mubr.f32.gmra.mrb[0].mxu0 %v189
    %v266 = vpop.f32.mrb[0].mxu0
    %v267 = vadd.f32 %v170, %v266
    %v268 = vpop.f32.mrb[0].mxu0
    %269 = vmatprep.mubr.f32.mxu0 0.0
    %270 = vmatmul.mubr.f32.gmra.mrb[0].mxu0 %v192
    %v271 = vpop.f32.mrb[0].mxu0
    %v272 = vadd.f32 %v175, %v271
    %v273 = vpop.f32.mrb[0].mxu0
    %274 = vmatprep.mubr.f32.mxu0 0.0
    %275 = vmatmul.mubr.f32.gmra.mrb[0].mxu0 %v195
    %v276 = vpop.f32.mrb[0].mxu0
    %v277 = vadd.f32 %v180, %v276
    %v278 = vpop.f32.mrb[0].mxu0
    %279 = vmatprep.mubr.f32.mxu0 0.0
    %280 = vmatmul.mubr.f32.gmra.mrb[0].mxu0 %v198
    %v281 = vpop.f32.mrb[0].mxu0
    %v282 = vadd.f32 %v185, %v281
    %v283 = vpop.f32.mrb[0].mxu0
    %284 = vdwg.mxu0
    %v285 = vmax.f32 %v267, 0.0
    %v286 = vmax.f32 %v272, 0.0
    %v287 = vmax.f32 %v277, 0.0
    %v288 = vmax.f32 %v282, 0.0
    %v289 = vld [vmem:[%s5] sm:$0xff]
    %v290 = vld [vmem:[%s5 + $0x8] sm:$0xff]
    %v291 = vld [vmem:[%s6] sm:$0xff]
    %v292 = vld [vmem:[%s6 + $0x8] sm:$0xff]
    %294 = vset.pattern.permute.xlu0 0
    %295 = vperm.xlu0 %294, %v291
    %v296 = vpop.permute.xlu0 %295
    %299 = vset.pattern.permute.xlu0 0
    %300 = vperm.xlu0 %299, %v292
    %v301 = vpop.permute.xlu0 %300
    %v304 = vsel %vm187, %v289, 0
    %v307 = vsel %vm187, %v290, 0
    %309 = vmatprep.subr.mxu0 0.0
    %310 = vmatpush1.msra.mxu0 %v285
    %311 = vmatprep.subr.mxu0 0.0
    %312 = vmatpush1.msra.mxu0 %v286
    %313 = vmatprep.subr.mxu0 0.0
    %314 = vmatpush1.msra.mxu0 %v287
    %315 = vmatprep.subr.mxu0 0.0
    %316 = vmatpush1.msra.mxu0 %v288
    %317 = vmatprep.subr.mxu0 0.0
    %318 = vmatpush1.msra.mxu0 0.0
    %319 = vmatprep.subr.mxu0 0.0
    %320 = vmatpush1.msra.mxu0 0.0
    %321 = vmatprep.subr.mxu0 0.0
    %322 = vmatpush1.msra.mxu0 0.0
    %323 = vmatprep.subr.mxu0 0.0
    %324 = vmatpush1.msra.mxu0 0.0
    %325 = vmatprep.subr.mxu0 0.0
    %326 = vmatpush1.msra.mxu0 0.0
    %327 = vmatprep.subr.mxu0 0.0
    %328 = vmatpush1.msra.mxu0 0.0
    %329 = vmatprep.subr.mxu0 0.0
    %330 = vmatpush1.msra.mxu0 0.0
    %331 = vmatprep.subr.mxu0 0.0
    %332 = vmatpush1.msra.mxu0 0.0
    %333 = vmatprep.subr.mxu0 0.0
    %334 = vmatpush1.msra.mxu0 0.0
    %335 = vmatprep.subr.mxu0 0.0
    %336 = vmatpush1.msra.mxu0 0.0
    %337 = vmatprep.subr.mxu0 0.0
    %338 = vmatpush1.msra.mxu0 0.0
    %339 = vmatprep.subr.mxu0 0.0
    %340 = vmatpush1.msra.mxu0 0.0
    %341 = vmatprep.subr.mxu0 0.0
    %342 = vmatpush1.msra.mxu0 0.0
    %343 = vmatprep.subr.mxu0 0.0
    %344 = vmatpush1.msra.mxu0 0.0
    %345 = vmatprep.subr.mxu0 0.0
    %346 = vmatpush1.msra.mxu0 0.0
    %347 = vmatprep.subr.mxu0 0.0
    %348 = vmatpush1.msra.mxu0 0.0
    %349 = vmatprep.subr.mxu0 0.0
    %350 = vmatpush1.msra.mxu0 0.0
    %351 = vmatprep.subr.mxu0 0.0
    %352 = vmatpush1.msra.mxu0 0.0
    %353 = vmatprep.subr.mxu0 0.0
    %354 = vmatpush1.msra.mxu0 0.0
    %355 = vmatprep.subr.mxu0 0.0
    %356 = vmatpush1.msra.mxu0 0.0
    %357 = vmatprep.subr.mxu0 0.0
    %358 = vmatpush1.msra.mxu0 0.0
    %359 = vmatprep.subr.mxu0 0.0
    %360 = vmatpush1.msra.mxu0 0.0
    %361 = vmatprep.subr.mxu0 0.0
    %362 = vmatpush1.msra.mxu0 0.0
    %363 = vmatprep.subr.mxu0 0.0
    %364 = vmatpush1.msra.mxu0 0.0
    %365 = vmatprep.subr.mxu0 0.0
    %366 = vmatpush1.msra.mxu0 0.0
    %367 = vmatprep.subr.mxu0 0.0
    %368 = vmatpush1.msra.mxu0 0.0
    %369 = vmatprep.subr.mxu0 0.0
    %370 = vmatpush1.msra.mxu0 0.0
    %371 = vmatprep.subr.mxu0 0.0
    %372 = vmatpush1.msra.mxu0 0.0
    %373 = vmatprep.mubr.f32.mxu0 0.0
    %374 = vmatmul.mubr.f32.gmra.mrb[0].mxu0 %v304
    %v375 = vpop.f32.mrb[0].mxu0
    %v376 = vadd.f32 %v296, %v375
    %v377 = vpop.f32.mrb[0].mxu0
    %378 = vmatprep.mubr.f32.mxu0 0.0
    %379 = vmatmul.mubr.f32.gmra.mrb[0].mxu0 %v307
    %v380 = vpop.f32.mrb[0].mxu0
    %v381 = vadd.f32 %v301, %v380
    %v382 = vpop.f32.mrb[0].mxu0
    %383 = vdwg.mxu0
    %v384 = vlaneseq
    %v385 = vshrl.u32 %v384, 7
    %v386 = vadd.s32 %v385, 8
    %vm387 = vcmp.lt.s32.totalorder %v385, 8
    %vm388 = vcmp.lt.s32.totalorder %v386, 8
    %v389 = vsel %vm387, -1.0, -5.0
    %v390 = vsel %vm388, -1.0, -5.0
    %v391 = vsel %vm387, 1.0, 0.0
    %v392 = vsel %vm388, 1.0, 0.0
    %v393 = vsub.f32 %v391, %v389
    %v394 = vsub.f32 %v392, %v390
    %v395 = vmul.f32 %v393, 0.5
    %v396 = vmul.f32 %v394, 0.5
    %v397 = vtanh.pop %v376
    %v398 = vtanh.pop %v381
    %v399 = vadd.f32 %v397, 1.0
    %v400 = vadd.f32 %v398, 1.0
    %v401 = vmul.f32 %v395, %v399
    %v402 = vmul.f32 %v396, %v400
    %v403 = vadd.f32 %v389, %v401
    %v404 = vadd.f32 %v390, %v402
    %v405 = vmul.f32 %v403, 1.442695
    %v406 = vpow.pop %v405
    %v407 = vmul.f32 %v404, 1.442695
    %v408 = vpow.pop %v407
    %v409 = vsel %vm387, 1, 0
    %v410 = vsel %vm388, 1, 0
    %vm411 = vcmp.eq.s32.totalorder %v409, 1
    %vm412 = vcmp.eq.s32.totalorder %v410, 1
    %v413 = vsel %vm411, %v403, %v406
    %v414 = vsel %vm412, %v404, %v408
    %415 = vst [vmem:[#allocation2] sm:$0xff] %v413
    %416 = vst [vmem:[#allocation2 + $0x8] sm:$0xff] %v414
    // Predicated region
    $region30: #{tpu_custom_call.1} parent=1 // pred_check
      _
    $region31: #{tpu_custom_call.1} parent=1 // pred_check_branch
      %418 = sbr.rel (0) target = $region33
    $region32: #{tpu_custom_call.1} parent=1 // pred_region
      %s420 = ssub.s32 256, 256
      %421 = vsyncadd [#allocation3], %s420
      %s422 = sshll.u32 [#allocation2], 4
      %s423 = int_to_ptr.vmem [resolvable:$true] %s422
      %428 = dma.vmem_to_hbm [thread:$0]  %s423, 256, %s7, [#allocation3], 128, 128, 8
    $region33: #{tpu_custom_call.1} parent=1 // pred_fallthru
      _
    // Predicated region
    $region34: #{tpu_custom_call.1} parent=1 // pred_check
      _
    $region35: #{tpu_custom_call.1} parent=1 // pred_check_branch
      %430 = sbr.rel (0) target = $region37
    $region36: #{tpu_custom_call.1} parent=1 // pred_region
      %431 = dma.done [#allocation3], 256
    $region37: #{tpu_custom_call.1} parent=1 // pred_fallthru
      _
    %432 = vsyncpa [#allocation3], 1

</llo_original>
